<compile_context>
chip_gen: v5e
topology: v5e:2x2
jax: 0.10.0
libtpu: 0.0.40
codegen_flags: <defaults>
</compile_context>

<pallas_src>
import numpy as np
import jax
import jax.numpy as jnp
from jax.experimental import pallas as pl
from jax.experimental.pallas import tpu as pltpu


def _dropout2d_kernel(x_ref, mask_ref, o_ref):
    # x_ref/o_ref: (TILE_R, TILE_C) tile.  mask_ref: (1, TILE_C), broadcast
    # over the row (sublane) axis.  Pure load-mul-store on the VPU.
    o_ref[...] = x_ref[...] * mask_ref[...]


def _pick_tiles(nc, hw, itemsize):
    """Pick (tile_r, tile_c): sublane/lane aligned, each x/out buffer <= ~4 MiB
    so 2 inputs + 2 outputs double-buffered stay well inside scoped VMEM on all
    TPU generations."""
    sublane = {4: 8, 2: 16, 1: 32}.get(itemsize, 8)
    lane = 128
    per_buffer_budget = 4 * 1024 * 1024

    # Column tile: keep the full row width (lane-dense stores, resident mask)
    # unless even `sublane` rows at full width would exceed the budget.
    if hw <= lane or hw * sublane * itemsize <= per_buffer_budget:
        tile_c = hw
    else:
        max_cols = max(lane, per_buffer_budget // (sublane * itemsize))
        tile_c = min(hw, (max_cols // lane) * lane)

    # Row tile.
    if nc <= sublane:
        tile_r = nc  # full dim is always a legal block shape
    else:
        max_rows = max(sublane, per_buffer_budget // max(1, tile_c * itemsize))
        tile_r = min(nc, max_rows, 1024)
        tile_r = max(sublane, (tile_r // sublane) * sublane)
    return tile_r, tile_c


def dropout2d(x, *, p=0.5, dim1=0, dim2=1, seed=0, training=True):
    """JAX/Pallas equivalent of fairseq Dropout2d.forward."""
    if (not training) or p == 0.0:
        return x
    if p >= 1.0:
        return jnp.zeros_like(x)

    ndim = x.ndim
    drop_dims = sorted({dim1 % ndim, dim2 % ndim})
    other = [i for i in range(ndim) if i not in drop_dims]
    perm = drop_dims + other

    # Fast path: default (dim1, dim2) are already the leading dims, so the
    # permutation is the identity and the 2-D view is a free reshape.
    identity_perm = perm == list(range(ndim))
    xp = x if identity_perm else jnp.transpose(x, perm)
    # TODO(synk): for non-default dims, express the permutation through the
    # BlockSpec index_map instead of a materialized transpose round trip.

    nc = int(np.prod([x.shape[d] for d in drop_dims], dtype=np.int64))
    hw = int(np.prod([x.shape[d] for d in other], dtype=np.int64))  # empty -> 1
    x2d = xp.reshape(nc, hw)

    # Shared dropout mask over the non-(dim1, dim2) positions, computed once
    # and reused by every grid step (identical mask across dim1/dim2 slices).
    key = jax.random.PRNGKey(int(seed))
    keep = jax.random.bernoulli(key, 1.0 - p, (1, hw))
    scale = jnp.asarray(1.0 / (1.0 - p), dtype=x.dtype)
    mask2d = jnp.where(keep, scale, jnp.zeros((), dtype=x.dtype)).astype(x.dtype)

    tile_r, tile_c = _pick_tiles(nc, hw, x2d.dtype.itemsize)
    grid = (pl.cdiv(nc, tile_r), pl.cdiv(hw, tile_c))

    out2d = pl.pallas_call(
        _dropout2d_kernel,
        out_shape=jax.ShapeDtypeStruct((nc, hw), x2d.dtype),
        grid=grid,
        in_specs=[
            pl.BlockSpec((tile_r, tile_c), lambda i, j: (i, j)),  # x tile
            pl.BlockSpec((1, tile_c), lambda i, j: (0, j)),       # shared mask
        ],
        out_specs=pl.BlockSpec((tile_r, tile_c), lambda i, j: (i, j)),
        compiler_params=pltpu.CompilerParams(
            dimension_semantics=("parallel", "parallel"),
            vmem_limit_bytes=32 * 1024 * 1024,
        ),
    )(x2d, mask2d)

    out = out2d.reshape(xp.shape)
    return out if identity_perm else jnp.transpose(out, list(np.argsort(perm)))


if __name__ == "__main__":
    key = jax.random.PRNGKey(0)
    N, C, H, W = 2, 4, 16, 16
    x = jax.random.normal(key, (N, C, H, W), dtype=jnp.float32)

    p = 0.5
    y = dropout2d(x, p=p, dim1=0, dim2=1, seed=1234, training=True)
    y = jax.block_until_ready(y)

    # --- sanity checks on semantics ---
    assert y.shape == x.shape and y.dtype == x.dtype
    ratio = np.asarray(y) / np.asarray(x)  # x is continuous -> never exactly 0
    scale = 1.0 / (1.0 - p)
    ok_vals = np.all(
        np.isclose(ratio, 0.0, atol=1e-5) | np.isclose(ratio, scale, atol=1e-4)
    )
    # The mask must be identical across the (dim1, dim2) = (N, C) axes.
    same_mask = np.allclose(ratio, ratio[0:1, 0:1, :, :], atol=1e-4)
    assert ok_vals and same_mask, "dropout2d mask semantics violated"

    # Eval mode is identity.
    y_eval = jax.block_until_ready(dropout2d(x, p=p, training=False))
    assert np.allclose(np.asarray(y_eval), np.asarray(x))

    print("KERNEL_OK")
</pallas_src>

<mosaic_0001>
module attributes {stable_mosaic.version = 11 : i64} {
  func.func @_dropout2d_kernel(%arg0: i32, %arg1: i32, %arg2: memref<8x256xf32, #tpu.memory_space<vmem>>, %arg3: memref<1x256xf32, #tpu.memory_space<vmem>>, %arg4: memref<8x256xf32, #tpu.memory_space<vmem>>) attributes {dimension_semantics = [#tpu.dimension_semantics<parallel>, #tpu.dimension_semantics<parallel>], iteration_bounds = array<i64: 1, 1>, scalar_prefetch = 0 : i64, scratch_operands = 0 : i64, tpu.core_type = #tpu.core_type<tc>, window_params = [{transform_indices = @transform_0, window_bounds = array<i64: 8, 256>}, {transform_indices = @transform_1, window_bounds = array<i64: 1, 256>}, {transform_indices = @transform_2, window_bounds = array<i64: 8, 256>}]} {
    %c0 = arith.constant 0 : index
    %c0_0 = arith.constant 0 : index
    %0 = vector.load %arg2[%c0, %c0_0] : memref<8x256xf32, #tpu.memory_space<vmem>>, vector<8x256xf32>
    %c0_1 = arith.constant 0 : index
    %c0_2 = arith.constant 0 : index
    %1 = vector.load %arg3[%c0_1, %c0_2] : memref<1x256xf32, #tpu.memory_space<vmem>>, vector<1x256xf32>
    %2 = vector.broadcast %1 : vector<1x256xf32> to vector<8x256xf32>
    %3 = arith.mulf %0, %2 : vector<8x256xf32>
    %c0_3 = arith.constant 0 : index
    %c0_4 = arith.constant 0 : index
    %4 = vector.load %arg4[%c0_3, %c0_4] : memref<8x256xf32, #tpu.memory_space<vmem>>, vector<8x256xf32>
    tpu.vector_store %arg4[%c0_3, %c0_4], %3 {strides = array<i32>} : memref<8x256xf32, #tpu.memory_space<vmem>>, vector<8x256xf32>,
    return
  }
  func.func @transform_0(%arg0: i32, %arg1: i32) -> (i32, i32) {
    %c0_i32 = arith.constant 0 : i32
    return %arg0, %arg1 : i32, i32
  }
  func.func @transform_1(%arg0: i32, %arg1: i32) -> (i32, i32) {
    %c0_i32 = arith.constant 0 : i32
    %c0_i32_0 = arith.constant 0 : i32
    return %c0_i32, %arg1 : i32, i32
  }
  func.func @transform_2(%arg0: i32, %arg1: i32) -> (i32, i32) {
    %c0_i32 = arith.constant 0 : i32
    return %arg0, %arg1 : i32, i32
  }
}

</mosaic_0001>

<llo_original>
// kernel: tpu_custom_call.1
$region0: #{tpu_custom_call.1}
  #allocation0 [shape = 'u32[]', space=smem, size = 0x4, offset = 0x4, fixed_abs, tag = 'smem constant byte address 0x4 - core index']
  #allocation1 [shape = 'u32[72,128]{1,0:T(1,128)}', space=vmem, size = 0x9000, scoped, tag = 'internal scratch']
  %s0 = inlined_call_operand.hbm [shape: f32[8,256], index: 0, kind: input, shape index: {}]
  %s1 = inlined_call_operand.hbm [shape: f32[1,256], index: 1, kind: input, shape index: {}]
  %s2 = inlined_call_operand.hbm [shape: f32[8,256], index: 2, kind: output, shape index: {}]
  %s3 = sld [smem:[#allocation0]]
  $region26: #{tpu_custom_call.1} parent=0
    _
  %s5 = ssub.s32 1, %s3
  %s6 = scalar_select 0, %s5, %s3
  $region1: #{tpu_custom_call.1} parent=0
    #allocation2 [shape = 'u8[8192]{0}', space=vmem, size = 0x2000, scoped, tag = 'input window, operand 0, single buffered']
    #allocation3 [shape = 's32[1]{0}', space=sflag, size = 0x4, scoped, tag = 'scoped memory for tpu_custom_call.1']
    #allocation4 [shape = 's32[1]{0}', space=sflag, size = 0x4, scoped, tag = 'scoped memory for tpu_custom_call.1']
    #allocation5 [shape = 'u8[1024]{0}', space=vmem, size = 0x400, scoped, tag = 'input window, operand 1, single buffered']
    #allocation6 [shape = 's32[1]{0}', space=sflag, size = 0x4, scoped, tag = 'scoped memory for tpu_custom_call.1']
    #allocation7 [shape = 'u8[8192]{0}', space=vmem, size = 0x2000, scoped, tag = 'output window, operand 0, single buffered']
    %7 = vsyncpa [#allocation3], 0
    %8 = vsyncpa [#allocation6], 0
    %9 = vsyncpa [#allocation4], 0
    // Predicated region
    $region2: #{tpu_custom_call.1} parent=1 // pred_check
      _
    $region3: #{tpu_custom_call.1} parent=1 // pred_check_branch
      %11 = sbr.rel (0) target = $region5
    $region4: #{tpu_custom_call.1} parent=1 // pred_region
      %13 = vsyncadd [#allocation3], 0
      %s15 = sshll.u32 %s0, 4
      %s16 = int_to_ptr.hbm [resolvable:$true] %s15
      %s17 = sshll.u32 [#allocation2], 4
      %s18 = int_to_ptr.vmem [resolvable:$true] %s17
      %20 = dma.hbm_to_vmem [thread:$0]  %s16, 256, %s18, [#allocation3]
    $region5: #{tpu_custom_call.1} parent=1 // pred_fallthru
      _
    // Predicated region
    $region6: #{tpu_custom_call.1} parent=1 // pred_check
      _
    $region7: #{tpu_custom_call.1} parent=1 // pred_check_branch
      %22 = sbr.rel (0) target = $region9
    $region8: #{tpu_custom_call.1} parent=1 // pred_region
      %24 = vsyncadd [#allocation6], 0
      %s26 = sshll.u32 %s1, 4
      %s27 = int_to_ptr.hbm [resolvable:$true] %s26
      %s28 = sshll.u32 [#allocation5], 4
      %s29 = int_to_ptr.vmem [resolvable:$true] %s28
      %31 = dma.hbm_to_vmem [thread:$0]  %s27, 32, %s29, [#allocation6]
    $region9: #{tpu_custom_call.1} parent=1 // pred_fallthru
      _
    // Predicated region
    $region10: #{tpu_custom_call.1} parent=1 // pred_check
      _
    $region11: #{tpu_custom_call.1} parent=1 // pred_check_branch
      %33 = sbr.rel (0) target = $region13
    $region12: #{tpu_custom_call.1} parent=1 // pred_region
      %35 = dma.done [#allocation3], 256
    $region13: #{tpu_custom_call.1} parent=1 // pred_fallthru
      _
    // Predicated region
    $region14: #{tpu_custom_call.1} parent=1 // pred_check
      _
    $region15: #{tpu_custom_call.1} parent=1 // pred_check_branch
      %37 = sbr.rel (0) target = $region17
    $region16: #{tpu_custom_call.1} parent=1 // pred_region
      %39 = dma.done [#allocation6], 32
    $region17: #{tpu_custom_call.1} parent=1 // pred_fallthru
      _
    %v40 = vld [vmem:[#allocation2] sm:$0xff]
    %v41 = vld [vmem:[#allocation2 + $0x8] sm:$0xff]
    %v42 = vld [vmem:[#allocation5] sm:$0x3]
    %v44 = vperm.slane %v42, 0
    %v45 = vperm.slane %v42, 1
    %v48 = vmul.f32 %v40, %v44
    %v49 = vmul.f32 %v41, %v45
    %50 = vst [vmem:[#allocation7] sm:$0xff] %v48
    %51 = vst [vmem:[#allocation7 + $0x8] sm:$0xff] %v49
    // Predicated region
    $region18: #{tpu_custom_call.1} parent=1 // pred_check
      _
    $region19: #{tpu_custom_call.1} parent=1 // pred_check_branch
      %53 = sbr.rel (0) target = $region21
    $region20: #{tpu_custom_call.1} parent=1 // pred_region
      %55 = vsyncadd [#allocation4], 0
      %s57 = sshll.u32 [#allocation7], 4
      %s58 = int_to_ptr.vmem [resolvable:$true] %s57
      %s59 = sshll.u32 %s2, 4
      %s60 = int_to_ptr.hbm [resolvable:$true] %s59
      %62 = dma.vmem_to_hbm [thread:$0]  %s58, 256, %s60, [#allocation4]
    $region21: #{tpu_custom_call.1} parent=1 // pred_fallthru
      _
    // Predicated region
    $region22: #{tpu_custom_call.1} parent=1 // pred_check
      _
    $region23: #{tpu_custom_call.1} parent=1 // pred_check_branch
      %64 = sbr.rel (0) target = $region25
    $region24: #{tpu_custom_call.1} parent=1 // pred_region
      %66 = dma.done [#allocation4], 256
    $region25: #{tpu_custom_call.1} parent=1 // pred_fallthru
      _
    %67 = vsyncpa [#allocation3], 1
    %68 = vsyncpa [#allocation6], 1
    %69 = vsyncpa [#allocation4], 1

</llo_original>
